<compile_context>
chip_gen: v7x
topology: tpu7x:2x2x1
jax: 0.10.0
libtpu: 0.0.40
codegen_flags: <defaults>
</compile_context>

<pallas_src>
import functools

import jax
import jax.numpy as jnp
from jax import lax
from jax.experimental import pallas as pl
from jax.experimental.pallas import tpu as pltpu


_LANE = 128
_NEG = -1e30  # plain Python float: never captured as a kernel constant


def _oic_partial_kernel(feat_ref, queue_ref, m_ref, l_ref, *,
                        temperature, splits, tiles_per_split, valid_in_last):
    """One grid step = one (tq, D) queue tile of one queue split.

    Maintains an online logsumexp (m, l) per row for this split's queue
    columns.  The implicit "ones" column and the masked mean are handled in a
    tiny JAX epilogue so the splits stay independent (v7x 2-TC friendly).
    """
    s = pl.program_id(0)   # queue split (parallel; may land on the 2nd TC)
    k = pl.program_id(1)   # queue tile inside the split (reduction)

    @pl.when(k == 0)
    def _init():
        m_ref[...] = jnp.full(m_ref.shape, _NEG, m_ref.dtype)
        l_ref[...] = jnp.zeros(l_ref.shape, l_ref.dtype)

    # (N, D) x (tq, D) contracted on D -> (N, tq) on the MXU, f32 accumulation.
    # Temperature is applied to the f32 scores (matches the reference numerics;
    # free VALU filler under the HBM-bound stream).
    scores = lax.dot_general(
        feat_ref[...], queue_ref[...],
        dimension_numbers=(((1,), (1,)), ((), ())),
        preferred_element_type=jnp.float32) * temperature

    def _update(sc):
        m_prev = m_ref[0]                                        # (N, 1)
        m_new = jnp.maximum(m_prev, sc.max(axis=-1, keepdims=True))
        l_ref[0] = (l_ref[0] * jnp.exp(m_prev - m_new)
                    + jnp.exp(sc - m_new).sum(axis=-1, keepdims=True))
        m_ref[0] = m_new

    tq = scores.shape[1]
    if valid_in_last >= tq:
        # Q is a multiple of the tile width: no masking anywhere (static).
        _update(scores)
    else:
        # Only the very last global tile has padded columns; interior tiles
        # skip the iota/compare/select entirely.
        def _masked():
            col = lax.broadcasted_iota(jnp.int32, scores.shape, 1)
            return jnp.where(col < valid_in_last, scores, _NEG)

        if splits == 1 and tiles_per_split == 1:
            _update(_masked())
        else:
            is_last = jnp.logical_and(s == splits - 1,
                                      k == tiles_per_split - 1)

            @pl.when(is_last)
            def _():
                _update(_masked())

            @pl.when(jnp.logical_not(is_last))
            def _():
                _update(scores)


def _device_defaults():
    """(tile_bytes, n_splits) per TPU generation; conservative fallback."""
    try:
        kind = jax.devices()[0].device_kind.lower()
    except Exception:  # pragma: no cover - no device info available
        kind = ""
    if "v7" in kind:
        return 4 << 20, 2   # ~3.2 TB/s per TC, 2 TCs -> big tiles + 2 splits
    if "v5" in kind:
        return 2 << 20, 1   # 1 TC, 16 MiB scoped VMEM default
    return 2 << 20, 1       # v6e / unknown: 1 TC


def oic_loss(reid_feat, target, queue, *, temperature=10.0,
             tile_bytes=None, n_splits=None):
    """Pallas implementation of OICLoss.forward (scalar loss).

    reid_feat: (N, D), target: (N,) int, queue: (Q, D).  Inputs are streamed
    in their own dtype -- keep the persistent lookup table in bf16 to halve
    the kernel's HBM traffic (it is ~100% queue bytes).
    """
    n, d = reid_feat.shape
    q, d2 = queue.shape
    assert d == d2, (reid_feat.shape, queue.shape)
    if reid_feat.dtype != queue.dtype:
        reid_feat = reid_feat.astype(queue.dtype)
    itemsize = queue.dtype.itemsize

    auto_bytes, auto_splits = _device_defaults()
    tile_bytes = auto_bytes if tile_bytes is None else int(tile_bytes)
    splits_req = auto_splits if n_splits is None else int(n_splits)

    # --- tile-width selection (in units of 128 columns) ---------------------
    lanes = pl.cdiv(q, _LANE)
    t_max = max(1, min(tile_bytes // (d * itemsize * _LANE), lanes))
    num_tiles = pl.cdiv(lanes, t_max)
    splits = max(1, min(splits_req, num_tiles))
    t = t_max
    if splits > 1 and num_tiles % splits:
        # Re-derive the tile width so the tile count divides evenly across the
        # splits: no clamped duplicate tile, no wasted DMA, balanced TC load.
        t = next((c for c in range(t_max, 0, -1)
                  if pl.cdiv(lanes, c) % splits == 0), None)
        if t is None:
            splits, t = 1, t_max
        num_tiles = pl.cdiv(lanes, t)
    tq = t * _LANE
    tiles_per_split = num_tiles // splits
    valid_in_last = q - (num_tiles - 1) * tq       # 1 .. tq real columns

    kernel = functools.partial(
        _oic_partial_kernel,
        temperature=float(temperature),
        splits=int(splits),
        tiles_per_split=int(tiles_per_split),
        valid_in_last=int(valid_in_last))

    m_parts, l_parts = pl.pallas_call(
        kernel,
        out_shape=(jax.ShapeDtypeStruct((splits, n, 1), jnp.float32),
                   jax.ShapeDtypeStruct((splits, n, 1), jnp.float32)),
        grid_spec=pltpu.PrefetchScalarGridSpec(
            num_scalar_prefetch=0,
            grid=(splits, tiles_per_split),
            in_specs=[
                # Resident features (tiny, fetched once; native dtype).
                pl.BlockSpec((n, d), lambda s, k: (0, 0)),
                # Streamed queue tile, native (Q, D) layout -> no wrapper
                # transpose; multi-MiB rows keep the DMA at roofline.
                pl.BlockSpec((tq, d),
                             lambda s, k: (s * tiles_per_split + k, 0)),
            ],
            out_specs=(
                pl.BlockSpec((1, n, 1), lambda s, k: (s, 0, 0)),
                pl.BlockSpec((1, n, 1), lambda s, k: (s, 0, 0)),
            ),
        ),
        compiler_params=pltpu.CompilerParams(
            dimension_semantics=("parallel", "arbitrary")),
    )(reid_feat, queue)

    # O(N) epilogue: merge per-split (m, l), fold in the implicit "ones" logit
    # (value == temperature), then masked mean over unlabeled (target < 0) rows.
    t_f32 = jnp.float32(temperature)
    m = m_parts[..., 0]                               # (S, N)
    l = l_parts[..., 0]                               # (S, N)
    m_tot = jnp.maximum(jnp.max(m, axis=0), t_f32)    # (N,)
    l_tot = jnp.sum(l * jnp.exp(m - m_tot), axis=0) + jnp.exp(t_f32 - m_tot)
    row_loss = m_tot + jnp.log(l_tot) - t_f32         # logsumexp - target logit
    valid = (target.reshape(-1) < 0).astype(jnp.float32)
    n_valid = valid.sum()
    loss = jnp.sum(row_loss * valid) / jnp.maximum(n_valid, 1.0)
    return jnp.where(n_valid > 0, loss, jnp.float32(0.0))


def oic_loss_ref(reid_feat, target, queue, *, temperature=10.0):
    """Plain-JAX reference mirroring the PyTorch forward (f32)."""
    cmp_score = reid_feat.astype(jnp.float32) @ queue.astype(jnp.float32).T
    valid = target.reshape(-1) < 0
    n_valid = jnp.sum(valid)
    logits = jnp.concatenate(
        [jnp.ones((reid_feat.shape[0], 1), cmp_score.dtype), cmp_score],
        axis=1) * temperature
    row_loss = jax.nn.logsumexp(logits, axis=1) - logits[:, 0]
    loss = jnp.sum(row_loss * valid) / jnp.maximum(n_valid, 1)
    return jnp.where(n_valid > 0, loss, 0.0)


if __name__ == "__main__":
    # Small synthetic shapes consistent with the module:
    #   N boxes, reid_dim D, queue_size Q.
    N, D = 8, 128
    TEMP = 10.0

    key = jax.random.PRNGKey(0)
    k_feat, k_q1, k_q2, k_q3 = jax.random.split(key, 4)

    feat = jax.random.normal(k_feat, (N, D), jnp.float32)
    feat = feat / jnp.linalg.norm(feat, axis=1, keepdims=True)
    # negative ids = unlabeled (participate in the loss), >=0 = labeled
    target = jnp.array([-1, 3, -1, -1, 7, -1, 2, -1], jnp.int32)

    def unit_rows(k, qsz):
        x = jax.random.normal(k, (qsz, D), jnp.float32)
        return x / jnp.linalg.norm(x, axis=1, keepdims=True)

    # 1) f32 path, Q=256 -> single tile, single split.
    queue = unit_rows(k_q1, 256)
    ref = oic_loss_ref(feat, target, queue, temperature=TEMP)
    out = jax.block_until_ready(oic_loss(feat, target, queue, temperature=TEMP))
    assert jnp.allclose(out, ref, rtol=2e-3, atol=2e-3), (out, ref)

    # 2) Degenerate "no valid rows" branch -> exactly 0.0 (no NaN path).
    out0 = jax.block_until_ready(
        oic_loss(feat, jnp.abs(target), queue, temperature=TEMP))
    assert jnp.allclose(out0, 0.0), out0

    # 3) Multi-tile + forced 2-way split, Q divisible by the tile width.
    queue2 = unit_rows(k_q2, 512)
    ref2 = oic_loss_ref(feat, target, queue2, temperature=TEMP)
    out2 = jax.block_until_ready(
        oic_loss(feat, target, queue2, temperature=TEMP,
                 tile_bytes=128 * D * 4, n_splits=2))
    assert jnp.allclose(out2, ref2, rtol=2e-3, atol=2e-3), (out2, ref2)

    # 4) Q not a multiple of 128 -> masked final tile under pl.when, 2 splits.
    queue3 = unit_rows(k_q3, 500)
    ref3 = oic_loss_ref(feat, target, queue3, temperature=TEMP)
    out3 = jax.block_until_ready(
        oic_loss(feat, target, queue3, temperature=TEMP,
                 tile_bytes=128 * D * 4, n_splits=2))
    assert jnp.allclose(out3, ref3, rtol=2e-3, atol=2e-3), (out3, ref3)

    # 5) Odd tile count with a 2-split request -> clean fallback to 1 split
    #    (no clamped duplicate tiles, no wasted DMA).
    queue4 = unit_rows(k_q1, 384)
    ref4 = oic_loss_ref(feat, target, queue4, temperature=TEMP)
    out4 = jax.block_until_ready(
        oic_loss(feat, target, queue4, temperature=TEMP,
                 tile_bytes=128 * D * 4, n_splits=2))
    assert jnp.allclose(out4, ref4, rtol=2e-3, atol=2e-3), (out4, ref4)

    # 6) bf16 streaming path (persistent table kept in bf16 by the caller):
    #    half the HBM traffic, f32 MXU accumulation and f32 (m, l) state.
    out_bf16 = jax.block_until_ready(
        oic_loss(feat.astype(jnp.bfloat16), target,
                 queue.astype(jnp.bfloat16), temperature=TEMP))
    assert jnp.allclose(out_bf16, ref, atol=1e-1), (out_bf16, ref)

    print("KERNEL_OK")
</pallas_src>

<mosaic_0001>
module attributes {stable_mosaic.version = 11 : i64} {
  func.func @_oic_partial_kernel(%arg0: i32, %arg1: i32, %arg2: memref<8x128xf32, #tpu.memory_space<vmem>>, %arg3: memref<256x128xf32, #tpu.memory_space<vmem>>, %arg4: memref<1x8x1xf32, #tpu.memory_space<vmem>>, %arg5: memref<1x8x1xf32, #tpu.memory_space<vmem>>) attributes {dimension_semantics = [#tpu.dimension_semantics<parallel>, #tpu.dimension_semantics<arbitrary>], iteration_bounds = array<i64: 1, 1>, scalar_prefetch = 0 : i64, scratch_operands = 0 : i64, tpu.core_type = #tpu.core_type<tc>, window_params = [{pipeline_mode = #tpu.pipeline_mode<synchronous>, transform_indices = @transform_0, window_bounds = array<i64: 8, 128>}, {transform_indices = @transform_1, window_bounds = array<i64: 256, 128>}, {transform_indices = @transform_2, window_bounds = array<i64: 1, 8, 1>}, {transform_indices = @transform_3, window_bounds = array<i64: 1, 8, 1>}]} {
    %c0_i32 = arith.constant 0 : i32
    %0 = arith.cmpi eq, %arg1, %c0_i32 : i32
    %1 = arith.extui %0 : i1 to i32
    %c0_i32_0 = arith.constant 0 : i32
    %2 = arith.cmpi ne, %1, %c0_i32_0 : i32
    scf.if %2 {
      %cst_19 = arith.constant -1.000000e+30 : f32
      %30 = vector.broadcast %cst_19 : f32 to vector<1x8x1xf32>
      %c0_20 = arith.constant 0 : index
      %c0_21 = arith.constant 0 : index
      %c0_22 = arith.constant 0 : index
      %31 = vector.load %arg4[%c0_20, %c0_21, %c0_22] : memref<1x8x1xf32, #tpu.memory_space<vmem>>, vector<1x8x1xf32>
      tpu.vector_store %arg4[%c0_20, %c0_21, %c0_22], %30 {strides = array<i32>} : memref<1x8x1xf32, #tpu.memory_space<vmem>>, vector<1x8x1xf32>,
      %cst_23 = arith.constant 0.000000e+00 : f32
      %32 = vector.broadcast %cst_23 : f32 to vector<1x8x1xf32>
      %c0_24 = arith.constant 0 : index
      %c0_25 = arith.constant 0 : index
      %c0_26 = arith.constant 0 : index
      %33 = vector.load %arg5[%c0_24, %c0_25, %c0_26] : memref<1x8x1xf32, #tpu.memory_space<vmem>>, vector<1x8x1xf32>
      tpu.vector_store %arg5[%c0_24, %c0_25, %c0_26], %32 {strides = array<i32>} : memref<1x8x1xf32, #tpu.memory_space<vmem>>, vector<1x8x1xf32>,
    } else {
    }
    %c0 = arith.constant 0 : index
    %c0_1 = arith.constant 0 : index
    %3 = vector.load %arg2[%c0, %c0_1] : memref<8x128xf32, #tpu.memory_space<vmem>>, vector<8x128xf32>
    %c0_2 = arith.constant 0 : index
    %c0_3 = arith.constant 0 : index
    %4 = vector.load %arg3[%c0_2, %c0_3] : memref<256x128xf32, #tpu.memory_space<vmem>>, vector<256x128xf32>
    %cst = arith.constant dense<0.000000e+00> : vector<8x256xf32>
    %5 = tpu.matmul %3, %4, %cst {dimension_numbers = #tpu.dot_dimension_numbers<[1], [1], [0], [0], [0, 0, 1, 0], [], []>} : vector<8x128xf32>, vector<256x128xf32>, vector<8x256xf32> -> vector<8x256xf32>
    %cst_4 = arith.constant 1.000000e+01 : f32
    %6 = vector.broadcast %cst_4 : f32 to vector<8x256xf32>
    %7 = arith.mulf %5, %6 : vector<8x256xf32>
    %c0_5 = arith.constant 0 : index
    %c0_6 = arith.constant 0 : index
    %c0_7 = arith.constant 0 : index
    %8 = vector.load %arg4[%c0_5, %c0_6, %c0_7] : memref<1x8x1xf32, #tpu.memory_space<vmem>>, vector<1x8x1xf32>
    %9 = vector.shape_cast %8 : vector<1x8x1xf32> to vector<8x1xf32>
    %cst_8 = arith.constant dense<0xFF800000> : vector<8xf32>
    %10 = vector.multi_reduction <maximumf>, %7, %cst_8 [1] : vector<8x256xf32> to vector<8xf32>
    %11 = vector.shape_cast %10 : vector<8xf32> to vector<8x1xf32>
    %12 = arith.maximumf %9, %11 : vector<8x1xf32>
    %c0_9 = arith.constant 0 : index
    %c0_10 = arith.constant 0 : index
    %c0_11 = arith.constant 0 : index
    %13 = vector.load %arg5[%c0_9, %c0_10, %c0_11] : memref<1x8x1xf32, #tpu.memory_space<vmem>>, vector<1x8x1xf32>
    %14 = vector.shape_cast %13 : vector<1x8x1xf32> to vector<8x1xf32>
    %15 = arith.subf %9, %12 : vector<8x1xf32>
    %16 = math.exp %15 : vector<8x1xf32>
    %17 = arith.mulf %14, %16 : vector<8x1xf32>
    %18 = vector.broadcast %12 : vector<8x1xf32> to vector<8x256xf32>
    %19 = arith.subf %7, %18 : vector<8x256xf32>
    %20 = math.exp %19 : vector<8x256xf32>
    %cst_12 = arith.constant dense<0.000000e+00> : vector<8xf32>
    %21 = vector.multi_reduction <add>, %20, %cst_12 [1] : vector<8x256xf32> to vector<8xf32>
    %22 = vector.shape_cast %21 : vector<8xf32> to vector<8x1xf32>
    %23 = arith.addf %17, %22 : vector<8x1xf32>
    %c0_13 = arith.constant 0 : index
    %c0_14 = arith.constant 0 : index
    %c0_15 = arith.constant 0 : index
    %24 = vector.load %arg5[%c0_13, %c0_14, %c0_15] : memref<1x8x1xf32, #tpu.memory_space<vmem>>, vector<1x8x1xf32>
    %25 = vector.shape_cast %24 : vector<1x8x1xf32> to vector<8x1xf32>
    %26 = vector.shape_cast %23 : vector<8x1xf32> to vector<1x8x1xf32>
    tpu.vector_store %arg5[%c0_13, %c0_14, %c0_15], %26 {strides = array<i32>} : memref<1x8x1xf32, #tpu.memory_space<vmem>>, vector<1x8x1xf32>,
    %c0_16 = arith.constant 0 : index
    %c0_17 = arith.constant 0 : index
    %c0_18 = arith.constant 0 : index
    %27 = vector.load %arg4[%c0_16, %c0_17, %c0_18] : memref<1x8x1xf32, #tpu.memory_space<vmem>>, vector<1x8x1xf32>
    %28 = vector.shape_cast %27 : vector<1x8x1xf32> to vector<8x1xf32>
    %29 = vector.shape_cast %12 : vector<8x1xf32> to vector<1x8x1xf32>
    tpu.vector_store %arg4[%c0_16, %c0_17, %c0_18], %29 {strides = array<i32>} : memref<1x8x1xf32, #tpu.memory_space<vmem>>, vector<1x8x1xf32>,
    return
  }
  func.func @transform_0(%arg0: i32, %arg1: i32) -> (i32, i32) {
    %c0_i32 = arith.constant 0 : i32
    %c0_i32_0 = arith.constant 0 : i32
    %c0_i32_1 = arith.constant 0 : i32
    return %c0_i32, %c0_i32_0 : i32, i32
  }
  func.func @transform_1(%arg0: i32, %arg1: i32) -> (i32, i32) {
    %c1_i32 = arith.constant 1 : i32
    %0 = arith.muli %arg0, %c1_i32 : i32
    %1 = arith.addi %0, %arg1 : i32
    %c0_i32 = arith.constant 0 : i32
    %c0_i32_0 = arith.constant 0 : i32
    return %1, %c0_i32 : i32, i32
  }
  func.func @transform_2(%arg0: i32, %arg1: i32) -> (i32, i32, i32) {
    %c0_i32 = arith.constant 0 : i32
    %c0_i32_0 = arith.constant 0 : i32
    %c0_i32_1 = arith.constant 0 : i32
    return %arg0, %c0_i32, %c0_i32_0 : i32, i32, i32
  }
  func.func @transform_3(%arg0: i32, %arg1: i32) -> (i32, i32, i32) {
    %c0_i32 = arith.constant 0 : i32
    %c0_i32_0 = arith.constant 0 : i32
    %c0_i32_1 = arith.constant 0 : i32
    return %arg0, %c0_i32, %c0_i32_0 : i32, i32, i32
  }
}

</mosaic_0001>

<llo_original>
// kernel: tpu_custom_call.1
$region0: #{tpu_custom_call.1}
  #allocation0 [shape = 'u32[]', space=smem, size = 0x4, offset = 0x4, fixed_abs, tag = 'smem constant byte address 0x4 - core index']
  #allocation1 [shape = 'u32[144,128]{1,0:T(1,128)}', space=vmem, size = 0x12000, scoped, tag = 'internal scratch']
  %s0 = inlined_call_operand.hbm [shape: f32[8,128], index: 0, kind: input, shape index: {}]
  %s1 = inlined_call_operand.hbm [shape: f32[256,128], index: 1, kind: input, shape index: {}]
  %s2 = inlined_call_operand.vmem [shape: f32[1,8,1], index: 2, kind: output, shape index: {0}]
  %s3 = inlined_call_operand.vmem [shape: f32[1,8,1], index: 3, kind: output, shape index: {1}]
  %4 = xla_tuple %s2, %s3
  %s5 = sld [smem:[#allocation0]]
  $region38: #{tpu_custom_call.1} parent=0
    _
  %s7 = ssub.s32 1, %s5
  %s8 = scalar_select 0, %s7, %s5
  $region1: #{tpu_custom_call.1} parent=0
    #allocation2 [shape = 'u8[4096]{0}', space=vmem, size = 0x1000, scoped, tag = 'input window, operand 0, single buffered']
    #allocation3 [shape = 's32[1]{0}', space=sflag, size = 0x4, scoped, tag = 'scoped memory for tpu_custom_call.1']
    #allocation4 [shape = 'u8[131072]{0}', space=vmem, size = 0x20000, scoped, tag = 'input window, operand 1, single buffered']
    #allocation5 [shape = 's32[1]{0}', space=sflag, size = 0x4, scoped, tag = 'scoped memory for tpu_custom_call.1']
    %9 = vsyncpa [#allocation3], 0
    %10 = vsyncpa [#allocation5], 0
    // Predicated region
    $region2: #{tpu_custom_call.1} parent=1 // pred_check
      _
    $region3: #{tpu_custom_call.1} parent=1 // pred_check_branch
      %12 = sbr.rel (0) target = $region5
    $region4: #{tpu_custom_call.1} parent=1 // pred_region
      %s14 = ssub.s32 128, 128
      %15 = vsyncadd [#allocation3], %s14
      %s17 = sshll.u32 [#allocation2], 4
      %s18 = int_to_ptr.vmem [resolvable:$true] %s17
      %20 = dma.hbm_to_vmem [thread:$0]  %s0, 128, %s18, [#allocation3]
    $region5: #{tpu_custom_call.1} parent=1 // pred_fallthru
      _
    // Predicated region
    $region6: #{tpu_custom_call.1} parent=1 // pred_check
      _
    $region7: #{tpu_custom_call.1} parent=1 // pred_check_branch
      %22 = sbr.rel (0) target = $region9
    $region8: #{tpu_custom_call.1} parent=1 // pred_region
      %s23 = sadd.s32 0, 0
      %s24 = smul.u32 32, %s23
      %s26 = ssub.s32 4096, 4096
      %27 = vsyncadd [#allocation5], %s26
      %s28 = smul.addr %s24, 128
      %s29 = scalar_lea.hbm %s1, %s28
      %s30 = sshll.u32 [#allocation4], 4
      %s31 = int_to_ptr.vmem [resolvable:$true] %s30
      %36 = dma.hbm_to_vmem [thread:$0]  %s29, 4096, %s31, [#allocation5], 128, 128, 8
    $region9: #{tpu_custom_call.1} parent=1 // pred_fallthru
      _
    // Predicated region
    $region10: #{tpu_custom_call.1} parent=1 // pred_check
      _
    $region11: #{tpu_custom_call.1} parent=1 // pred_check_branch
      %38 = sbr.rel (0) target = $region13
    $region12: #{tpu_custom_call.1} parent=1 // pred_region
      %39 = dma.done [#allocation3], 128
    $region13: #{tpu_custom_call.1} parent=1 // pred_fallthru
      _
    // Predicated region
    $region14: #{tpu_custom_call.1} parent=1 // pred_check
      _
    $region15: #{tpu_custom_call.1} parent=1 // pred_check_branch
      %41 = sbr.rel (0) target = $region17
    $region16: #{tpu_custom_call.1} parent=1 // pred_region
      %42 = dma.done [#allocation5], 4096
    $region17: #{tpu_custom_call.1} parent=1 // pred_fallthru
      _
    %s43 = sadd.s32 0, 0
    %s44 = smul.u32 32, %s43
    %p45 = scmp.eq.s32.totalorder 0, 0
    // Predicated region
    $region18: #{tpu_custom_call.1} parent=1 // pred_check
      %p46 = pneg %p45
    $region19: #{tpu_custom_call.1} parent=1 // pred_check_branch
      %48 = sbr.rel (%p46) target = $region21
    $region20: #{tpu_custom_call.1} parent=1 // pred_region
      %vm49 = vcmask 7168
      %50 = vst.msk [vmem:[%s2] sm:$0xff] %vm49, -1e+30
      %51 = vst.msk [vmem:[%s3] sm:$0xff] %vm49, 0.0
    $region21: #{tpu_custom_call.1} parent=1 // pred_fallthru
      _
    %v52 = vld [vmem:[#allocation2] sm:$0xff]
    %v53 = vld [vmem:[#allocation4] sm:$0xff]
    %v54 = vld [vmem:[#allocation4 + $0x8] sm:$0xff]
    %v55 = vld [vmem:[#allocation4 + $0x10] sm:$0xff]
    %v56 = vld [vmem:[#allocation4 + $0x18] sm:$0xff]
    %v57 = vld [vmem:[#allocation4 + $0x20] sm:$0xff]
    %v58 = vld [vmem:[#allocation4 + $0x28] sm:$0xff]
    %v59 = vld [vmem:[#allocation4 + $0x30] sm:$0xff]
    %v60 = vld [vmem:[#allocation4 + $0x38] sm:$0xff]
    %v61 = vld [vmem:[#allocation4 + $0x40] sm:$0xff]
    %v62 = vld [vmem:[#allocation4 + $0x48] sm:$0xff]
    %v63 = vld [vmem:[#allocation4 + $0x50] sm:$0xff]
    %v64 = vld [vmem:[#allocation4 + $0x58] sm:$0xff]
    %v65 = vld [vmem:[#allocation4 + $0x60] sm:$0xff]
    %v66 = vld [vmem:[#allocation4 + $0x68] sm:$0xff]
    %v67 = vld [vmem:[#allocation4 + $0x70] sm:$0xff]
    %v68 = vld [vmem:[#allocation4 + $0x78] sm:$0xff]
    %v69 = vld [vmem:[#allocation4 + $0x80] sm:$0xff]
    %v70 = vld [vmem:[#allocation4 + $0x88] sm:$0xff]
    %v71 = vld [vmem:[#allocation4 + $0x90] sm:$0xff]
    %v72 = vld [vmem:[#allocation4 + $0x98] sm:$0xff]
    %v73 = vld [vmem:[#allocation4 + $0xa0] sm:$0xff]
    %v74 = vld [vmem:[#allocation4 + $0xa8] sm:$0xff]
    %v75 = vld [vmem:[#allocation4 + $0xb0] sm:$0xff]
    %v76 = vld [vmem:[#allocation4 + $0xb8] sm:$0xff]
    %v77 = vld [vmem:[#allocation4 + $0xc0] sm:$0xff]
    %v78 = vld [vmem:[#allocation4 + $0xc8] sm:$0xff]
    %v79 = vld [vmem:[#allocation4 + $0xd0] sm:$0xff]
    %v80 = vld [vmem:[#allocation4 + $0xd8] sm:$0xff]
    %v81 = vld [vmem:[#allocation4 + $0xe0] sm:$0xff]
    %v82 = vld [vmem:[#allocation4 + $0xe8] sm:$0xff]
    %v83 = vld [vmem:[#allocation4 + $0xf0] sm:$0xff]
    %v84 = vld [vmem:[#allocation4 + $0xf8] sm:$0xff]
    %85 = vmatprep.subr.mxu0 0.0
    %86 = vmatpush1.xpose.msra.mxu0 %v53
    %87 = vmatprep.subr.mxu0 0.0
    %88 = vmatpush1.xpose.msra.mxu0 %v54
    %89 = vmatprep.subr.mxu0 0.0
    %90 = vmatpush1.xpose.msra.mxu0 %v55
    %91 = vmatprep.subr.mxu0 0.0
    %92 = vmatpush1.xpose.msra.mxu0 %v56
    %93 = vmatprep.subr.mxu0 0.0
    %94 = vmatpush1.xpose.msra.mxu0 %v57
    %95 = vmatprep.subr.mxu0 0.0
    %96 = vmatpush1.xpose.msra.mxu0 %v58
    %97 = vmatprep.subr.mxu0 0.0
    %98 = vmatpush1.xpose.msra.mxu0 %v59
    %99 = vmatprep.subr.mxu0 0.0
    %100 = vmatpush1.xpose.msra.mxu0 %v60
    %101 = vmatprep.subr.mxu0 0.0
    %102 = vmatpush1.xpose.msra.mxu0 %v61
    %103 = vmatprep.subr.mxu0 0.0
    %104 = vmatpush1.xpose.msra.mxu0 %v62
    %105 = vmatprep.subr.mxu0 0.0
    %106 = vmatpush1.xpose.msra.mxu0 %v63
    %107 = vmatprep.subr.mxu0 0.0
    %108 = vmatpush1.xpose.msra.mxu0 %v64
    %109 = vmatprep.subr.mxu0 0.0
    %110 = vmatpush1.xpose.msra.mxu0 %v65
    %111 = vmatprep.subr.mxu0 0.0
    %112 = vmatpush1.xpose.msra.mxu0 %v66
    %113 = vmatprep.subr.mxu0 0.0
    %114 = vmatpush1.xpose.msra.mxu0 %v67
    %115 = vmatprep.subr.mxu0 0.0
    %116 = vmatpush1.xpose.msra.mxu0 %v68
    %117 = vmatprep.subr.mxu0 0.0
    %118 = vmatpush1.xpose.msra.mxu0 %v69
    %119 = vmatprep.subr.mxu0 0.0
    %120 = vmatpush1.xpose.msra.mxu0 %v70
    %121 = vmatprep.subr.mxu0 0.0
    %122 = vmatpush1.xpose.msra.mxu0 %v71
    %123 = vmatprep.subr.mxu0 0.0
    %124 = vmatpush1.xpose.msra.mxu0 %v72
    %125 = vmatprep.subr.mxu0 0.0
    %126 = vmatpush1.xpose.msra.mxu0 %v73
    %127 = vmatprep.subr.mxu0 0.0
    %128 = vmatpush1.xpose.msra.mxu0 %v74
    %129 = vmatprep.subr.mxu0 0.0
    %130 = vmatpush1.xpose.msra.mxu0 %v75
    %131 = vmatprep.subr.mxu0 0.0
    %132 = vmatpush1.xpose.msra.mxu0 %v76
    %133 = vmatprep.subr.mxu0 0.0
    %134 = vmatpush1.xpose.msra.mxu0 %v77
    %135 = vmatprep.subr.mxu0 0.0
    %136 = vmatpush1.xpose.msra.mxu0 %v78
    %137 = vmatprep.subr.mxu0 0.0
    %138 = vmatpush1.xpose.msra.mxu0 %v79
    %139 = vmatprep.subr.mxu0 0.0
    %140 = vmatpush1.xpose.msra.mxu0 %v80
    %141 = vmatprep.subr.mxu0 0.0
    %142 = vmatpush1.xpose.msra.mxu0 %v81
    %143 = vmatprep.subr.mxu0 0.0
    %144 = vmatpush1.xpose.msra.mxu0 %v82
    %145 = vmatprep.subr.mxu0 0.0
    %146 = vmatpush1.xpose.msra.mxu0 %v83
    %147 = vmatprep.subr.mxu0 0.0
    %148 = vmatpush1.xpose.msra.mxu0 %v84
    %149 = vmatprep.mubr.f32.mxu0 0.0
    %150 = vmatmul.mubr.f32.gmra.mrb[0].mxu0 %v52
    %v151 = vpop.f32.mrb[0].mxu0
    %v152 = vadd.f32 0.0, %v151
    %v153 = vpop.f32.mrb[0].mxu0
    %v154 = vadd.f32 0.0, %v153
    %155 = vdwg.mxu0
    %v156 = vmul.f32 %v152, 10.0
    %v157 = vmul.f32 %v154, 10.0
    %v158 = vld [vmem:[%s2] sm:$0xff]
    %v159 = vmax.f32 %v156, %v157
    %160 = vmax.xlane.f32.xlu0 %v159
    %v161 = vpop.xlane.xlu0 %160
    %v162 = vmax.f32 %v158, %v161
    %v163 = vld [vmem:[%s3] sm:$0xff]
    %v164 = vsub.f32 %v158, %v162
    %v165 = vmul.f32 %v164, 1.442695
    %v166 = vpow.pop %v165
    %v167 = vmul.f32 %v163, %v166
    %169 = vset.pattern.permute.xlu0 0
    %170 = vperm.xlu0 %169, %v162
    %v171 = vpop.permute.xlu0 %170
    %v173 = vsub.f32 %v156, %v171
    %v174 = vsub.f32 %v157, %v171
    %v175 = vmul.f32 %v173, 1.442695
    %v176 = vpow.pop %v175
    %v177 = vmul.f32 %v174, 1.442695
    %v178 = vpow.pop %v177
    %v179 = vadd.f32 %v176, %v178
    %180 = vadd.xlane.f32.xlu0 %v179
    %v181 = vpop.xlane.xlu0 %180
    %v182 = vadd.f32 %v167, %v181
    %vm183 = vcmask 7168
    %184 = vst.msk [vmem:[%s3] sm:$0xff] %vm183, %v182
    %185 = vst.msk [vmem:[%s2] sm:$0xff] %vm183, %v162
    // Predicated region
    $region22: #{tpu_custom_call.1} parent=1 // pred_check
      _
    $region23: #{tpu_custom_call.1} parent=1 // pred_check_branch
      %187 = sbr.rel (0) target = $region25
    $region24: #{tpu_custom_call.1} parent=1 // pred_region
      _
    $region25: #{tpu_custom_call.1} parent=1 // pred_fallthru
      _
    // Predicated region
    $region26: #{tpu_custom_call.1} parent=1 // pred_check
      _
    $region27: #{tpu_custom_call.1} parent=1 // pred_check_branch
      %189 = sbr.rel (0) target = $region29
    $region28: #{tpu_custom_call.1} parent=1 // pred_region
      _
    $region29: #{tpu_custom_call.1} parent=1 // pred_fallthru
      _
    // Predicated region
    $region30: #{tpu_custom_call.1} parent=1 // pred_check
      _
    $region31: #{tpu_custom_call.1} parent=1 // pred_check_branch
      %191 = sbr.rel (0) target = $region33
    $region32: #{tpu_custom_call.1} parent=1 // pred_region
      _
    $region33: #{tpu_custom_call.1} parent=1 // pred_fallthru
      _
    // Predicated region
    $region34: #{tpu_custom_call.1} parent=1 // pred_check
      _
    $region35: #{tpu_custom_call.1} parent=1 // pred_check_branch
      %193 = sbr.rel (0) target = $region37
    $region36: #{tpu_custom_call.1} parent=1 // pred_region
      _
    $region37: #{tpu_custom_call.1} parent=1 // pred_fallthru
      _
    %194 = vsyncpa [#allocation3], 1
    %195 = vsyncpa [#allocation5], 1

</llo_original>
